<compile_context>
chip_gen: v5e
topology: v5e:2x2
jax: 0.10.0
libtpu: 0.0.40
codegen_flags: <defaults>
</compile_context>

<pallas_src>
import functools

import jax
import jax.numpy as jnp
import numpy as np
from jax.experimental import pallas as pl
from jax.experimental.pallas import tpu as pltpu


def _convblock_kernel(x_ref, mask_ref, w1_ref, s1_ref, b1_ref,
                      w2_ref, s2_ref, b2_ref, out_ref, *, C, H, W):
    """One batch element per grid step.

    x_ref    : (1, C, H*W) VMEM -- lane-dense input (also provides the residual)
    mask_ref : (9, H*W)    VMEM -- per-tap border-validity masks (0/1), zero padding
    w*_ref   : (C, 9*C)    VMEM -- conv weights, columns ordered (tap, ci)
    s*/b*_ref: (C, 1)      VMEM -- folded BatchNorm(+conv bias) scale / shift
    out_ref  : (1, C, H*W) VMEM
    """
    HW = H * W
    x = x_ref[0]                      # (C, HW)
    masks = mask_ref[...]             # (9, HW)

    def conv3x3(a, w_ref):
        # im2col: 9 shifted copies of `a`, out-of-image positions zeroed by the
        # precomputed masks, stacked to (9*C, HW).  The whole multiply-accumulate
        # is a single MXU matmul with f32 accumulation.
        parts = []
        for dh in range(3):
            for dw in range(3):
                off = (dh - 1) * W + (dw - 1)
                t = dh * 3 + dw
                if off == 0:
                    parts.append(a)
                else:
                    # value at flat position p must come from position p + off;
                    # wrapped elements are zeroed by the border mask.
                    shifted = jnp.roll(a, -off, axis=1)
                    parts.append(shifted * masks[t:t + 1, :])
        patches = jnp.concatenate(parts, axis=0)                  # (9*C, HW)
        return jnp.dot(w_ref[...], patches,
                       preferred_element_type=jnp.float32)        # (C, HW)

    # ---- conv1 -> folded BN1 -> ReLU ---------------------------------------
    h1 = jnp.maximum(s1_ref[...] * conv3x3(x, w1_ref) + b1_ref[...], 0.0)
    # TODO(synk): nn.Dropout is modeled in eval mode (identity); the training-mode
    # random mask is not reproducible and is omitted.

    # ---- conv2 -> folded BN2 -> ReLU ---------------------------------------
    h2 = jnp.maximum(s2_ref[...] * conv3x3(h1, w2_ref) + b2_ref[...], 0.0)

    # ---- residual add + LayerNorm([H, W]) ----------------------------------
    # Freshly constructed nn.LayerNorm: weight=1, bias=0, eps=1e-5, biased variance
    # over (H, W) per (n, c).  Fused single-pass statistics: the two cross-lane sums
    # go to the XLU, rsqrt to the EUP; the final store is lane-dense and unmasked.
    y = h2 + x
    inv_hw = 1.0 / HW
    mu = jnp.sum(y, axis=1, keepdims=True) * inv_hw
    ms = jnp.sum(y * y, axis=1, keepdims=True) * inv_hw
    var = ms - mu * mu
    out_ref[0] = (y - mu) * jax.lax.rsqrt(var + 1e-5)


def _tap_masks(H, W):
    """Static 0/1 validity masks for the 9 taps of a 3x3 'same' convolution."""
    hh, ww = np.meshgrid(np.arange(H), np.arange(W), indexing="ij")
    hh = hh.reshape(-1)
    ww = ww.reshape(-1)
    m = np.zeros((9, H * W), np.float32)
    for dh in range(3):
        for dw in range(3):
            oh, ow = dh - 1, dw - 1
            valid = ((hh + oh >= 0) & (hh + oh < H) &
                     (ww + ow >= 0) & (ww + ow < W))
            m[dh * 3 + dw] = valid.astype(np.float32)
    return jnp.asarray(m)


def conv_block_forward(x, params):
    """Pallas implementation of ConvBlock.forward (inference semantics)."""
    N, C, H, W = x.shape
    HW = H * W
    eps = 1e-5

    # Fold BN (eval mode) + conv bias into per-channel scale/shift.
    s1 = params["g1"] / jnp.sqrt(params["v1"] + eps)
    b1 = params["be1"] + s1 * (params["b1"] - params["m1"])
    s2 = params["g2"] / jnp.sqrt(params["v2"] + eps)
    b2 = params["be2"] + s2 * (params["b2"] - params["m2"])

    # Lane-dense layouts.
    x_flat = x.reshape(N, C, HW).astype(jnp.float32)
    # Weight (C_out, C_in, 3, 3) -> (C_out, 9*C_in) with column order (tap, ci),
    # matching the in-kernel patch concatenation order.
    w1m = jnp.transpose(params["w1"], (0, 2, 3, 1)).reshape(C, 9 * C).astype(jnp.float32)
    w2m = jnp.transpose(params["w2"], (0, 2, 3, 1)).reshape(C, 9 * C).astype(jnp.float32)
    masks = _tap_masks(H, W)
    s1c = s1.reshape(C, 1).astype(jnp.float32)
    b1c = b1.reshape(C, 1).astype(jnp.float32)
    s2c = s2.reshape(C, 1).astype(jnp.float32)
    b2c = b2.reshape(C, 1).astype(jnp.float32)

    kernel = functools.partial(_convblock_kernel, C=C, H=H, W=W)

    out_flat = pl.pallas_call(
        kernel,
        out_shape=jax.ShapeDtypeStruct((N, C, HW), jnp.float32),
        grid=(N,),
        in_specs=[
            pl.BlockSpec((1, C, HW), lambda n: (n, 0, 0)),   # x (lane-dense)
            pl.BlockSpec((9, HW), lambda n: (0, 0)),         # border masks
            pl.BlockSpec((C, 9 * C), lambda n: (0, 0)),      # w1
            pl.BlockSpec((C, 1), lambda n: (0, 0)),          # s1
            pl.BlockSpec((C, 1), lambda n: (0, 0)),          # b1
            pl.BlockSpec((C, 9 * C), lambda n: (0, 0)),      # w2
            pl.BlockSpec((C, 1), lambda n: (0, 0)),          # s2
            pl.BlockSpec((C, 1), lambda n: (0, 0)),          # b2
        ],
        out_specs=pl.BlockSpec((1, C, HW), lambda n: (n, 0, 0)),
        compiler_params=pltpu.CompilerParams(
            dimension_semantics=("parallel",)),               # v7x: 2 TCs split batch
    )(x_flat, masks, w1m, s1c, b1c, w2m, s2c, b2c)

    return out_flat.reshape(N, C, H, W)


def reference_forward(x, p):
    """Plain-JAX reference (eval-mode BN, dropout identity), full-f32 convs."""
    eps = 1e-5

    def conv(h, w, b):
        y = jax.lax.conv_general_dilated(
            h, w, window_strides=(1, 1), padding=((1, 1), (1, 1)),
            dimension_numbers=("NCHW", "OIHW", "NCHW"),
            precision=jax.lax.Precision.HIGHEST)
        return y + b[None, :, None, None]

    def bn(h, g, be, m, v):
        return ((h - m[None, :, None, None])
                * (g / jnp.sqrt(v + eps))[None, :, None, None]
                + be[None, :, None, None])

    h = jax.nn.relu(bn(conv(x, p["w1"], p["b1"]), p["g1"], p["be1"], p["m1"], p["v1"]))
    h = jax.nn.relu(bn(conv(h, p["w2"], p["b2"]), p["g2"], p["be2"], p["m2"], p["v2"]))
    y = h + x
    mu = jnp.mean(y, axis=(2, 3), keepdims=True)
    var = jnp.mean((y - mu) ** 2, axis=(2, 3), keepdims=True)
    return (y - mu) / jnp.sqrt(var + 1e-5)


if __name__ == "__main__":
    # Residual add requires in_channels == out_channels.
    N, C, H, W = 2, 4, 16, 16
    key = jax.random.PRNGKey(0)
    ks = jax.random.split(key, 13)

    x = jax.random.normal(ks[0], (N, C, H, W), jnp.float32)
    params = {
        "w1": 0.1 * jax.random.normal(ks[1], (C, C, 3, 3), jnp.float32),
        "b1": 0.1 * jax.random.normal(ks[2], (C,), jnp.float32),
        "g1": 1.0 + 0.1 * jax.random.normal(ks[3], (C,), jnp.float32),
        "be1": 0.1 * jax.random.normal(ks[4], (C,), jnp.float32),
        "m1": 0.1 * jax.random.normal(ks[5], (C,), jnp.float32),
        "v1": 1.0 + 0.1 * jnp.abs(jax.random.normal(ks[6], (C,), jnp.float32)),
        "w2": 0.1 * jax.random.normal(ks[7], (C, C, 3, 3), jnp.float32),
        "b2": 0.1 * jax.random.normal(ks[8], (C,), jnp.float32),
        "g2": 1.0 + 0.1 * jax.random.normal(ks[9], (C,), jnp.float32),
        "be2": 0.1 * jax.random.normal(ks[10], (C,), jnp.float32),
        "m2": 0.1 * jax.random.normal(ks[11], (C,), jnp.float32),
        "v2": 1.0 + 0.1 * jnp.abs(jax.random.normal(ks[12], (C,), jnp.float32)),
    }

    out = jax.jit(conv_block_forward)(x, params)
    out = jax.block_until_ready(out)
    assert out.shape == (N, C, H, W)

    ref = reference_forward(x, params)
    # Tolerance covers the MXU's bf16-pass decomposition of f32 matmuls (if chosen by
    # the backend) while still catching any layout / shift / mask / fold bugs.
    np.testing.assert_allclose(np.asarray(out), np.asarray(ref), rtol=5e-3, atol=5e-3)

    print("KERNEL_OK")
</pallas_src>

<mosaic_0001>
module attributes {stable_mosaic.version = 11 : i64} {
  func.func @_convblock_kernel(%arg0: i32, %arg1: memref<1x4x256xf32, #tpu.memory_space<vmem>>, %arg2: memref<9x256xf32, #tpu.memory_space<vmem>>, %arg3: memref<4x36xf32, #tpu.memory_space<vmem>>, %arg4: memref<4x1xf32, #tpu.memory_space<vmem>>, %arg5: memref<4x1xf32, #tpu.memory_space<vmem>>, %arg6: memref<4x36xf32, #tpu.memory_space<vmem>>, %arg7: memref<4x1xf32, #tpu.memory_space<vmem>>, %arg8: memref<4x1xf32, #tpu.memory_space<vmem>>, %arg9: memref<1x4x256xf32, #tpu.memory_space<vmem>>) attributes {dimension_semantics = [#tpu.dimension_semantics<parallel>], iteration_bounds = array<i64: 2>, scalar_prefetch = 0 : i64, scratch_operands = 0 : i64, tpu.core_type = #tpu.core_type<tc>, window_params = [{transform_indices = @transform_0, window_bounds = array<i64: 1, 4, 256>}, {pipeline_mode = #tpu.pipeline_mode<synchronous>, transform_indices = @transform_1, window_bounds = array<i64: 9, 256>}, {pipeline_mode = #tpu.pipeline_mode<synchronous>, transform_indices = @transform_2, window_bounds = array<i64: 4, 36>}, {pipeline_mode = #tpu.pipeline_mode<synchronous>, transform_indices = @transform_3, window_bounds = array<i64: 4, 1>}, {pipeline_mode = #tpu.pipeline_mode<synchronous>, transform_indices = @transform_4, window_bounds = array<i64: 4, 1>}, {pipeline_mode = #tpu.pipeline_mode<synchronous>, transform_indices = @transform_5, window_bounds = array<i64: 4, 36>}, {pipeline_mode = #tpu.pipeline_mode<synchronous>, transform_indices = @transform_6, window_bounds = array<i64: 4, 1>}, {pipeline_mode = #tpu.pipeline_mode<synchronous>, transform_indices = @transform_7, window_bounds = array<i64: 4, 1>}, {transform_indices = @transform_8, window_bounds = array<i64: 1, 4, 256>}]} {
    %c0 = arith.constant 0 : index
    %c0_0 = arith.constant 0 : index
    %c0_1 = arith.constant 0 : index
    %0 = vector.load %arg1[%c0, %c0_0, %c0_1] : memref<1x4x256xf32, #tpu.memory_space<vmem>>, vector<1x4x256xf32>
    %1 = vector.shape_cast %0 : vector<1x4x256xf32> to vector<4x256xf32>
    %c0_2 = arith.constant 0 : index
    %c0_3 = arith.constant 0 : index
    %2 = vector.load %arg2[%c0_2, %c0_3] : memref<9x256xf32, #tpu.memory_space<vmem>>, vector<9x256xf32>
    %c0_4 = arith.constant 0 : index
    %c0_5 = arith.constant 0 : index
    %3 = vector.load %arg4[%c0_4, %c0_5] : memref<4x1xf32, #tpu.memory_space<vmem>>, vector<4x1xf32>
    %4 = vector.extract_strided_slice %1 {offsets = [0, 239], sizes = [4, 17], strides = [1, 1]} : vector<4x256xf32> to vector<4x17xf32>
    %5 = vector.extract_strided_slice %1 {offsets = [0, 0], sizes = [4, 239], strides = [1, 1]} : vector<4x256xf32> to vector<4x239xf32>
    %6 = tpu.concatenate %4, %5 in 1 : vector<4x17xf32>, vector<4x239xf32> -> vector<4x256xf32>
    %7 = vector.extract_strided_slice %2 {offsets = [0, 0], sizes = [1, 256], strides = [1, 1]} : vector<9x256xf32> to vector<1x256xf32>
    %8 = vector.broadcast %7 : vector<1x256xf32> to vector<4x256xf32>
    %9 = arith.mulf %6, %8 : vector<4x256xf32>
    %10 = vector.extract_strided_slice %1 {offsets = [0, 240], sizes = [4, 16], strides = [1, 1]} : vector<4x256xf32> to vector<4x16xf32>
    %11 = vector.extract_strided_slice %1 {offsets = [0, 0], sizes = [4, 240], strides = [1, 1]} : vector<4x256xf32> to vector<4x240xf32>
    %12 = tpu.concatenate %10, %11 in 1 : vector<4x16xf32>, vector<4x240xf32> -> vector<4x256xf32>
    %13 = vector.extract_strided_slice %2 {offsets = [1, 0], sizes = [1, 256], strides = [1, 1]} : vector<9x256xf32> to vector<1x256xf32>
    %14 = vector.broadcast %13 : vector<1x256xf32> to vector<4x256xf32>
    %15 = arith.mulf %12, %14 : vector<4x256xf32>
    %16 = vector.extract_strided_slice %1 {offsets = [0, 241], sizes = [4, 15], strides = [1, 1]} : vector<4x256xf32> to vector<4x15xf32>
    %17 = vector.extract_strided_slice %1 {offsets = [0, 0], sizes = [4, 241], strides = [1, 1]} : vector<4x256xf32> to vector<4x241xf32>
    %18 = tpu.concatenate %16, %17 in 1 : vector<4x15xf32>, vector<4x241xf32> -> vector<4x256xf32>
    %19 = vector.extract_strided_slice %2 {offsets = [2, 0], sizes = [1, 256], strides = [1, 1]} : vector<9x256xf32> to vector<1x256xf32>
    %20 = vector.broadcast %19 : vector<1x256xf32> to vector<4x256xf32>
    %21 = arith.mulf %18, %20 : vector<4x256xf32>
    %22 = vector.extract_strided_slice %1 {offsets = [0, 255], sizes = [4, 1], strides = [1, 1]} : vector<4x256xf32> to vector<4x1xf32>
    %23 = vector.extract_strided_slice %1 {offsets = [0, 0], sizes = [4, 255], strides = [1, 1]} : vector<4x256xf32> to vector<4x255xf32>
    %24 = tpu.concatenate %22, %23 in 1 : vector<4x1xf32>, vector<4x255xf32> -> vector<4x256xf32>
    %25 = vector.extract_strided_slice %2 {offsets = [3, 0], sizes = [1, 256], strides = [1, 1]} : vector<9x256xf32> to vector<1x256xf32>
    %26 = vector.broadcast %25 : vector<1x256xf32> to vector<4x256xf32>
    %27 = arith.mulf %24, %26 : vector<4x256xf32>
    %28 = vector.extract_strided_slice %1 {offsets = [0, 1], sizes = [4, 255], strides = [1, 1]} : vector<4x256xf32> to vector<4x255xf32>
    %29 = vector.extract_strided_slice %1 {offsets = [0, 0], sizes = [4, 1], strides = [1, 1]} : vector<4x256xf32> to vector<4x1xf32>
    %30 = tpu.concatenate %28, %29 in 1 : vector<4x255xf32>, vector<4x1xf32> -> vector<4x256xf32>
    %31 = vector.extract_strided_slice %2 {offsets = [5, 0], sizes = [1, 256], strides = [1, 1]} : vector<9x256xf32> to vector<1x256xf32>
    %32 = vector.broadcast %31 : vector<1x256xf32> to vector<4x256xf32>
    %33 = arith.mulf %30, %32 : vector<4x256xf32>
    %34 = vector.extract_strided_slice %1 {offsets = [0, 15], sizes = [4, 241], strides = [1, 1]} : vector<4x256xf32> to vector<4x241xf32>
    %35 = vector.extract_strided_slice %1 {offsets = [0, 0], sizes = [4, 15], strides = [1, 1]} : vector<4x256xf32> to vector<4x15xf32>
    %36 = tpu.concatenate %34, %35 in 1 : vector<4x241xf32>, vector<4x15xf32> -> vector<4x256xf32>
    %37 = vector.extract_strided_slice %2 {offsets = [6, 0], sizes = [1, 256], strides = [1, 1]} : vector<9x256xf32> to vector<1x256xf32>
    %38 = vector.broadcast %37 : vector<1x256xf32> to vector<4x256xf32>
    %39 = arith.mulf %36, %38 : vector<4x256xf32>
    %40 = vector.extract_strided_slice %1 {offsets = [0, 16], sizes = [4, 240], strides = [1, 1]} : vector<4x256xf32> to vector<4x240xf32>
    %41 = vector.extract_strided_slice %1 {offsets = [0, 0], sizes = [4, 16], strides = [1, 1]} : vector<4x256xf32> to vector<4x16xf32>
    %42 = tpu.concatenate %40, %41 in 1 : vector<4x240xf32>, vector<4x16xf32> -> vector<4x256xf32>
    %43 = vector.extract_strided_slice %2 {offsets = [7, 0], sizes = [1, 256], strides = [1, 1]} : vector<9x256xf32> to vector<1x256xf32>
    %44 = vector.broadcast %43 : vector<1x256xf32> to vector<4x256xf32>
    %45 = arith.mulf %42, %44 : vector<4x256xf32>
    %46 = vector.extract_strided_slice %1 {offsets = [0, 17], sizes = [4, 239], strides = [1, 1]} : vector<4x256xf32> to vector<4x239xf32>
    %47 = vector.extract_strided_slice %1 {offsets = [0, 0], sizes = [4, 17], strides = [1, 1]} : vector<4x256xf32> to vector<4x17xf32>
    %48 = tpu.concatenate %46, %47 in 1 : vector<4x239xf32>, vector<4x17xf32> -> vector<4x256xf32>
    %49 = vector.extract_strided_slice %2 {offsets = [8, 0], sizes = [1, 256], strides = [1, 1]} : vector<9x256xf32> to vector<1x256xf32>
    %50 = vector.broadcast %49 : vector<1x256xf32> to vector<4x256xf32>
    %51 = arith.mulf %48, %50 : vector<4x256xf32>
    %52 = tpu.concatenate %9, %15, %21, %27, %1, %33, %39, %45, %51 in 0 : vector<4x256xf32>, vector<4x256xf32>, vector<4x256xf32>, vector<4x256xf32>, vector<4x256xf32>, vector<4x256xf32>, vector<4x256xf32>, vector<4x256xf32>, vector<4x256xf32> -> vector<36x256xf32>
    %c0_6 = arith.constant 0 : index
    %c0_7 = arith.constant 0 : index
    %53 = vector.load %arg3[%c0_6, %c0_7] : memref<4x36xf32, #tpu.memory_space<vmem>>, vector<4x36xf32>
    %cst = arith.constant dense<0.000000e+00> : vector<4x256xf32>
    %54 = tpu.matmul %53, %52, %cst {dimension_numbers = #tpu.dot_dimension_numbers<[1], [0], [0], [1], [0, 0, 1, 1], [], []>} : vector<4x36xf32>, vector<36x256xf32>, vector<4x256xf32> -> vector<4x256xf32>
    %55 = vector.broadcast %3 : vector<4x1xf32> to vector<4x256xf32>
    %56 = arith.mulf %55, %54 : vector<4x256xf32>
    %c0_8 = arith.constant 0 : index
    %c0_9 = arith.constant 0 : index
    %57 = vector.load %arg5[%c0_8, %c0_9] : memref<4x1xf32, #tpu.memory_space<vmem>>, vector<4x1xf32>
    %58 = vector.broadcast %57 : vector<4x1xf32> to vector<4x256xf32>
    %59 = arith.addf %56, %58 : vector<4x256xf32>
    %cst_10 = arith.constant 0.000000e+00 : f32
    %60 = vector.broadcast %cst_10 : f32 to vector<4x256xf32>
    %61 = arith.maximumf %59, %60 : vector<4x256xf32>
    %c0_11 = arith.constant 0 : index
    %c0_12 = arith.constant 0 : index
    %62 = vector.load %arg7[%c0_11, %c0_12] : memref<4x1xf32, #tpu.memory_space<vmem>>, vector<4x1xf32>
    %63 = vector.extract_strided_slice %61 {offsets = [0, 239], sizes = [4, 17], strides = [1, 1]} : vector<4x256xf32> to vector<4x17xf32>
    %64 = vector.extract_strided_slice %61 {offsets = [0, 0], sizes = [4, 239], strides = [1, 1]} : vector<4x256xf32> to vector<4x239xf32>
    %65 = tpu.concatenate %63, %64 in 1 : vector<4x17xf32>, vector<4x239xf32> -> vector<4x256xf32>
    %66 = vector.extract_strided_slice %2 {offsets = [0, 0], sizes = [1, 256], strides = [1, 1]} : vector<9x256xf32> to vector<1x256xf32>
    %67 = vector.broadcast %66 : vector<1x256xf32> to vector<4x256xf32>
    %68 = arith.mulf %65, %67 : vector<4x256xf32>
    %69 = vector.extract_strided_slice %61 {offsets = [0, 240], sizes = [4, 16], strides = [1, 1]} : vector<4x256xf32> to vector<4x16xf32>
    %70 = vector.extract_strided_slice %61 {offsets = [0, 0], sizes = [4, 240], strides = [1, 1]} : vector<4x256xf32> to vector<4x240xf32>
    %71 = tpu.concatenate %69, %70 in 1 : vector<4x16xf32>, vector<4x240xf32> -> vector<4x256xf32>
    %72 = vector.extract_strided_slice %2 {offsets = [1, 0], sizes = [1, 256], strides = [1, 1]} : vector<9x256xf32> to vector<1x256xf32>
    %73 = vector.broadcast %72 : vector<1x256xf32> to vector<4x256xf32>
    %74 = arith.mulf %71, %73 : vector<4x256xf32>
    %75 = vector.extract_strided_slice %61 {offsets = [0, 241], sizes = [4, 15], strides = [1, 1]} : vector<4x256xf32> to vector<4x15xf32>
    %76 = vector.extract_strided_slice %61 {offsets = [0, 0], sizes = [4, 241], strides = [1, 1]} : vector<4x256xf32> to vector<4x241xf32>
    %77 = tpu.concatenate %75, %76 in 1 : vector<4x15xf32>, vector<4x241xf32> -> vector<4x256xf32>
    %78 = vector.extract_strided_slice %2 {offsets = [2, 0], sizes = [1, 256], strides = [1, 1]} : vector<9x256xf32> to vector<1x256xf32>
    %79 = vector.broadcast %78 : vector<1x256xf32> to vector<4x256xf32>
    %80 = arith.mulf %77, %79 : vector<4x256xf32>
    %81 = vector.extract_strided_slice %61 {offsets = [0, 255], sizes = [4, 1], strides = [1, 1]} : vector<4x256xf32> to vector<4x1xf32>
    %82 = vector.extract_strided_slice %61 {offsets = [0, 0], sizes = [4, 255], strides = [1, 1]} : vector<4x256xf32> to vector<4x255xf32>
    %83 = tpu.concatenate %81, %82 in 1 : vector<4x1xf32>, vector<4x255xf32> -> vector<4x256xf32>
    %84 = vector.extract_strided_slice %2 {offsets = [3, 0], sizes = [1, 256], strides = [1, 1]} : vector<9x256xf32> to vector<1x256xf32>
    %85 = vector.broadcast %84 : vector<1x256xf32> to vector<4x256xf32>
    %86 = arith.mulf %83, %85 : vector<4x256xf32>
    %87 = vector.extract_strided_slice %61 {offsets = [0, 1], sizes = [4, 255], strides = [1, 1]} : vector<4x256xf32> to vector<4x255xf32>
    %88 = vector.extract_strided_slice %61 {offsets = [0, 0], sizes = [4, 1], strides = [1, 1]} : vector<4x256xf32> to vector<4x1xf32>
    %89 = tpu.concatenate %87, %88 in 1 : vector<4x255xf32>, vector<4x1xf32> -> vector<4x256xf32>
    %90 = vector.extract_strided_slice %2 {offsets = [5, 0], sizes = [1, 256], strides = [1, 1]} : vector<9x256xf32> to vector<1x256xf32>
    %91 = vector.broadcast %90 : vector<1x256xf32> to vector<4x256xf32>
    %92 = arith.mulf %89, %91 : vector<4x256xf32>
    %93 = vector.extract_strided_slice %61 {offsets = [0, 15], sizes = [4, 241], strides = [1, 1]} : vector<4x256xf32> to vector<4x241xf32>
    %94 = vector.extract_strided_slice %61 {offsets = [0, 0], sizes = [4, 15], strides = [1, 1]} : vector<4x256xf32> to vector<4x15xf32>
    %95 = tpu.concatenate %93, %94 in 1 : vector<4x241xf32>, vector<4x15xf32> -> vector<4x256xf32>
    %96 = vector.extract_strided_slice %2 {offsets = [6, 0], sizes = [1, 256], strides = [1, 1]} : vector<9x256xf32> to vector<1x256xf32>
    %97 = vector.broadcast %96 : vector<1x256xf32> to vector<4x256xf32>
    %98 = arith.mulf %95, %97 : vector<4x256xf32>
    %99 = vector.extract_strided_slice %61 {offsets = [0, 16], sizes = [4, 240], strides = [1, 1]} : vector<4x256xf32> to vector<4x240xf32>
    %100 = vector.extract_strided_slice %61 {offsets = [0, 0], sizes = [4, 16], strides = [1, 1]} : vector<4x256xf32> to vector<4x16xf32>
    %101 = tpu.concatenate %99, %100 in 1 : vector<4x240xf32>, vector<4x16xf32> -> vector<4x256xf32>
    %102 = vector.extract_strided_slice %2 {offsets = [7, 0], sizes = [1, 256], strides = [1, 1]} : vector<9x256xf32> to vector<1x256xf32>
    %103 = vector.broadcast %102 : vector<1x256xf32> to vector<4x256xf32>
    %104 = arith.mulf %101, %103 : vector<4x256xf32>
    %105 = vector.extract_strided_slice %61 {offsets = [0, 17], sizes = [4, 239], strides = [1, 1]} : vector<4x256xf32> to vector<4x239xf32>
    %106 = vector.extract_strided_slice %61 {offsets = [0, 0], sizes = [4, 17], strides = [1, 1]} : vector<4x256xf32> to vector<4x17xf32>
    %107 = tpu.concatenate %105, %106 in 1 : vector<4x239xf32>, vector<4x17xf32> -> vector<4x256xf32>
    %108 = vector.extract_strided_slice %2 {offsets = [8, 0], sizes = [1, 256], strides = [1, 1]} : vector<9x256xf32> to vector<1x256xf32>
    %109 = vector.broadcast %108 : vector<1x256xf32> to vector<4x256xf32>
    %110 = arith.mulf %107, %109 : vector<4x256xf32>
    %111 = tpu.concatenate %68, %74, %80, %86, %61, %92, %98, %104, %110 in 0 : vector<4x256xf32>, vector<4x256xf32>, vector<4x256xf32>, vector<4x256xf32>, vector<4x256xf32>, vector<4x256xf32>, vector<4x256xf32>, vector<4x256xf32>, vector<4x256xf32> -> vector<36x256xf32>
    %c0_13 = arith.constant 0 : index
    %c0_14 = arith.constant 0 : index
    %112 = vector.load %arg6[%c0_13, %c0_14] : memref<4x36xf32, #tpu.memory_space<vmem>>, vector<4x36xf32>
    %cst_15 = arith.constant dense<0.000000e+00> : vector<4x256xf32>
    %113 = tpu.matmul %112, %111, %cst_15 {dimension_numbers = #tpu.dot_dimension_numbers<[1], [0], [0], [1], [0, 0, 1, 1], [], []>} : vector<4x36xf32>, vector<36x256xf32>, vector<4x256xf32> -> vector<4x256xf32>
    %114 = vector.broadcast %62 : vector<4x1xf32> to vector<4x256xf32>
    %115 = arith.mulf %114, %113 : vector<4x256xf32>
    %c0_16 = arith.constant 0 : index
    %c0_17 = arith.constant 0 : index
    %116 = vector.load %arg8[%c0_16, %c0_17] : memref<4x1xf32, #tpu.memory_space<vmem>>, vector<4x1xf32>
    %117 = vector.broadcast %116 : vector<4x1xf32> to vector<4x256xf32>
    %118 = arith.addf %115, %117 : vector<4x256xf32>
    %cst_18 = arith.constant 0.000000e+00 : f32
    %119 = vector.broadcast %cst_18 : f32 to vector<4x256xf32>
    %120 = arith.maximumf %118, %119 : vector<4x256xf32>
    %121 = arith.addf %120, %1 : vector<4x256xf32>
    %cst_19 = arith.constant dense<0.000000e+00> : vector<4xf32>
    %122 = vector.multi_reduction <add>, %121, %cst_19 [1] : vector<4x256xf32> to vector<4xf32>
    %123 = vector.shape_cast %122 : vector<4xf32> to vector<4x1xf32>
    %cst_20 = arith.constant 3.906250e-03 : f32
    %124 = vector.broadcast %cst_20 : f32 to vector<4x1xf32>
    %125 = arith.mulf %123, %124 : vector<4x1xf32>
    %126 = arith.mulf %121, %121 : vector<4x256xf32>
    %cst_21 = arith.constant dense<0.000000e+00> : vector<4xf32>
    %127 = vector.multi_reduction <add>, %126, %cst_21 [1] : vector<4x256xf32> to vector<4xf32>
    %128 = vector.shape_cast %127 : vector<4xf32> to vector<4x1xf32>
    %cst_22 = arith.constant 3.906250e-03 : f32
    %129 = vector.broadcast %cst_22 : f32 to vector<4x1xf32>
    %130 = arith.mulf %128, %129 : vector<4x1xf32>
    %131 = arith.mulf %125, %125 : vector<4x1xf32>
    %132 = arith.subf %130, %131 : vector<4x1xf32>
    %133 = vector.broadcast %125 : vector<4x1xf32> to vector<4x256xf32>
    %134 = arith.subf %121, %133 : vector<4x256xf32>
    %cst_23 = arith.constant 9.99999974E-6 : f32
    %135 = vector.broadcast %cst_23 : f32 to vector<4x1xf32>
    %136 = arith.addf %132, %135 : vector<4x1xf32>
    %137 = math.rsqrt %136 : vector<4x1xf32>
    %138 = vector.broadcast %137 : vector<4x1xf32> to vector<4x256xf32>
    %139 = arith.mulf %134, %138 : vector<4x256xf32>
    %c0_24 = arith.constant 0 : index
    %c0_25 = arith.constant 0 : index
    %c0_26 = arith.constant 0 : index
    %140 = vector.load %arg9[%c0_24, %c0_25, %c0_26] : memref<1x4x256xf32, #tpu.memory_space<vmem>>, vector<1x4x256xf32>
    %141 = vector.shape_cast %140 : vector<1x4x256xf32> to vector<4x256xf32>
    %142 = vector.shape_cast %139 : vector<4x256xf32> to vector<1x4x256xf32>
    tpu.vector_store %arg9[%c0_24, %c0_25, %c0_26], %142 {strides = array<i32>} : memref<1x4x256xf32, #tpu.memory_space<vmem>>, vector<1x4x256xf32>,
    return
  }
  func.func @transform_0(%arg0: i32) -> (i32, i32, i32) {
    %c0_i32 = arith.constant 0 : i32
    %c0_i32_0 = arith.constant 0 : i32
    %c0_i32_1 = arith.constant 0 : i32
    return %arg0, %c0_i32, %c0_i32_0 : i32, i32, i32
  }
  func.func @transform_1(%arg0: i32) -> (i32, i32) {
    %c0_i32 = arith.constant 0 : i32
    %c0_i32_0 = arith.constant 0 : i32
    %c0_i32_1 = arith.constant 0 : i32
    return %c0_i32, %c0_i32_0 : i32, i32
  }
  func.func @transform_2(%arg0: i32) -> (i32, i32) {
    %c0_i32 = arith.constant 0 : i32
    %c0_i32_0 = arith.constant 0 : i32
    %c0_i32_1 = arith.constant 0 : i32
    return %c0_i32, %c0_i32_0 : i32, i32
  }
  func.func @transform_3(%arg0: i32) -> (i32, i32) {
    %c0_i32 = arith.constant 0 : i32
    %c0_i32_0 = arith.constant 0 : i32
    %c0_i32_1 = arith.constant 0 : i32
    return %c0_i32, %c0_i32_0 : i32, i32
  }
  func.func @transform_4(%arg0: i32) -> (i32, i32) {
    %c0_i32 = arith.constant 0 : i32
    %c0_i32_0 = arith.constant 0 : i32
    %c0_i32_1 = arith.constant 0 : i32
    return %c0_i32, %c0_i32_0 : i32, i32
  }
  func.func @transform_5(%arg0: i32) -> (i32, i32) {
    %c0_i32 = arith.constant 0 : i32
    %c0_i32_0 = arith.constant 0 : i32
    %c0_i32_1 = arith.constant 0 : i32
    return %c0_i32, %c0_i32_0 : i32, i32
  }
  func.func @transform_6(%arg0: i32) -> (i32, i32) {
    %c0_i32 = arith.constant 0 : i32
    %c0_i32_0 = arith.constant 0 : i32
    %c0_i32_1 = arith.constant 0 : i32
    return %c0_i32, %c0_i32_0 : i32, i32
  }
  func.func @transform_7(%arg0: i32) -> (i32, i32) {
    %c0_i32 = arith.constant 0 : i32
    %c0_i32_0 = arith.constant 0 : i32
    %c0_i32_1 = arith.constant 0 : i32
    return %c0_i32, %c0_i32_0 : i32, i32
  }
  func.func @transform_8(%arg0: i32) -> (i32, i32, i32) {
    %c0_i32 = arith.constant 0 : i32
    %c0_i32_0 = arith.constant 0 : i32
    %c0_i32_1 = arith.constant 0 : i32
    return %arg0, %c0_i32, %c0_i32_0 : i32, i32, i32
  }
}

</mosaic_0001>

<llo_original>
// kernel: conv_block_forward.1
$region0: #{conv_block_forward.1}
  #allocation0 [shape = 'u32[]', space=smem, size = 0x4, offset = 0x4, fixed_abs, tag = 'smem constant byte address 0x4 - core index']
  #allocation1 [shape = 'u32[72,128]{1,0:T(1,128)}', space=vmem, size = 0x9000, scoped, tag = 'internal scratch']
  %s0 = inlined_call_operand.vmem [shape: f32[2,4,256], index: 0, kind: input, shape index: {}]
  %s1 = inlined_call_operand.vmem [shape: f32[9,256], index: 1, kind: input, shape index: {}]
  %s2 = inlined_call_operand.vmem [shape: f32[4,36], index: 2, kind: input, shape index: {}]
  %s3 = inlined_call_operand.vmem [shape: f32[4,1], index: 3, kind: input, shape index: {}]
  %s4 = inlined_call_operand.vmem [shape: f32[4,1], index: 4, kind: input, shape index: {}]
  %s5 = inlined_call_operand.vmem [shape: f32[4,36], index: 5, kind: input, shape index: {}]
  %s6 = inlined_call_operand.vmem [shape: f32[4,1], index: 6, kind: input, shape index: {}]
  %s7 = inlined_call_operand.vmem [shape: f32[4,1], index: 7, kind: input, shape index: {}]
  %s8 = inlined_call_operand.vmem [shape: f32[2,4,256], index: 8, kind: output, shape index: {}]
  %s9 = sld [smem:[#allocation0]]
  $region65: #{conv_block_forward.1} parent=0
    _
  %s11 = ssub.s32 1, %s9
  %s12 = scalar_select 0, %s11, %s9
  loop: start=0, step=1, limit=4
  $region2: #{conv_block_forward.1} parent=0 // loop_pre_header
    _
  $region3: #{conv_block_forward.1} parent=0 // loop_header
    %s14 = sphi 0, %s18
    %p15 = scmp.ge.s32.totalorder %s14, 4
    %s24 = sphi 0, %s26
    %s27 = sphi 0, %s24
    %s28 = sphi 0, %s27
    %s44 = sphi 0, %s28
    %s48 = sphi 0, %s48
    %s50 = sphi 0, %s48
    %s51 = sphi 0, %s50
    %s65 = sphi 0, %s51
    %s69 = sphi 0, %s69
    %s71 = sphi 0, %s69
    %s72 = sphi 0, %s71
    %s86 = sphi 0, %s72
    %s90 = sphi 0, %s90
    %s92 = sphi 0, %s90
    %s93 = sphi 0, %s92
    %s107 = sphi 0, %s93
    %s111 = sphi 0, %s111
    %s113 = sphi 0, %s111
    %s114 = sphi 0, %s113
    %s128 = sphi 0, %s114
    %s132 = sphi 0, %s132
    %s134 = sphi 0, %s132
    %s135 = sphi 0, %s134
    %s149 = sphi 0, %s135
    %s153 = sphi 0, %s153
    %s155 = sphi 0, %s153
    %s156 = sphi 0, %s155
    %s170 = sphi 0, %s156
    %s174 = sphi 0, %s174
    %s176 = sphi 0, %s174
    %s177 = sphi 0, %s176
    %s191 = sphi 0, %s177
    %s197 = sphi 0, %s199
    %s200 = sphi 0, %s197
    %s201 = sphi 0, %s200
    %s217 = sphi 0, %s201
  $region4: #{conv_block_forward.1} parent=0 // loop_header_branch
    %17 = sbr.rel (%p15) target = $region8
  $region5: #{conv_block_forward.1} parent=0 // loop_body
    %s19 = ssub.s32 %s14, 1
    %s20 = ssub.s32 %s14, 2
    %s21 = sadd.s32 %s14, 1
    %s22 = ssub.s32 %s14, %s21
    %p23 = scmp.eq.s32.totalorder %s22, 0
    %s25 = sadd.s32 %s24, 1
    %s26 = scalar_select %p23, %s24, %s25
    %p29 = pneg %p23
    %p30 = scmp.eq.s32.totalorder %s14, 1
    %p31 = por %p29, %p30
    %p32 = scmp.ne.s32.totalorder %s24, %s27
    %p33 = scmp.eq.s32.totalorder %s14, 0
    %p34 = por %p32, %p33
    %p35 = scmp.ne.s32.totalorder %s24, %s27
    %p36 = scmp.eq.s32.totalorder %s19, 1
    %p37 = por %p35, %p36
    %p38 = scmp.ne.s32.totalorder %s27, %s28
    %p39 = scmp.eq.s32.totalorder %s19, 0
    %p40 = por %p38, %p39
    %p41 = scmp.ne.s32.totalorder %s27, %s28
    %p42 = scmp.eq.s32.totalorder %s20, 1
    %p43 = por %p41, %p42
    %p45 = scmp.ne.s32.totalorder %s28, %s44
    %p46 = scmp.eq.s32.totalorder %s20, 0
    %p47 = por %p45, %p46
    %s49 = sadd.s32 %s48, 1
    %p52 = scmp.eq.s32.totalorder %s14, 1
    %p53 = scmp.ne.s32.totalorder %s48, %s50
    %p54 = scmp.eq.s32.totalorder %s14, 0
    %p55 = por %p53, %p54
    %p56 = scmp.ne.s32.totalorder %s48, %s50
    %p57 = scmp.eq.s32.totalorder %s19, 1
    %p58 = por %p56, %p57
    %p59 = scmp.ne.s32.totalorder %s50, %s51
    %p60 = scmp.eq.s32.totalorder %s19, 0
    %p61 = por %p59, %p60
    %p62 = scmp.ne.s32.totalorder %s50, %s51
    %p63 = scmp.eq.s32.totalorder %s20, 1
    %p64 = por %p62, %p63
    %p66 = scmp.ne.s32.totalorder %s51, %s65
    %p67 = scmp.eq.s32.totalorder %s20, 0
    %p68 = por %p66, %p67
    %s70 = sadd.s32 %s69, 1
    %p73 = scmp.eq.s32.totalorder %s14, 1
    %p74 = scmp.ne.s32.totalorder %s69, %s71
    %p75 = scmp.eq.s32.totalorder %s14, 0
    %p76 = por %p74, %p75
    %p77 = scmp.ne.s32.totalorder %s69, %s71
    %p78 = scmp.eq.s32.totalorder %s19, 1
    %p79 = por %p77, %p78
    %p80 = scmp.ne.s32.totalorder %s71, %s72
    %p81 = scmp.eq.s32.totalorder %s19, 0
    %p82 = por %p80, %p81
    %p83 = scmp.ne.s32.totalorder %s71, %s72
    %p84 = scmp.eq.s32.totalorder %s20, 1
    %p85 = por %p83, %p84
    %p87 = scmp.ne.s32.totalorder %s72, %s86
    %p88 = scmp.eq.s32.totalorder %s20, 0
    %p89 = por %p87, %p88
    %s91 = sadd.s32 %s90, 1
    %p94 = scmp.eq.s32.totalorder %s14, 1
    %p95 = scmp.ne.s32.totalorder %s90, %s92
    %p96 = scmp.eq.s32.totalorder %s14, 0
    %p97 = por %p95, %p96
    %p98 = scmp.ne.s32.totalorder %s90, %s92
    %p99 = scmp.eq.s32.totalorder %s19, 1
    %p100 = por %p98, %p99
    %p101 = scmp.ne.s32.totalorder %s92, %s93
    %p102 = scmp.eq.s32.totalorder %s19, 0
    %p103 = por %p101, %p102
    %p104 = scmp.ne.s32.totalorder %s92, %s93
    %p105 = scmp.eq.s32.totalorder %s20, 1
    %p106 = por %p104, %p105
    %p108 = scmp.ne.s32.totalorder %s93, %s107
    %p109 = scmp.eq.s32.totalorder %s20, 0
    %p110 = por %p108, %p109
    %s112 = sadd.s32 %s111, 1
    %p115 = scmp.eq.s32.totalorder %s14, 1
    %p116 = scmp.ne.s32.totalorder %s111, %s113
    %p117 = scmp.eq.s32.totalorder %s14, 0
    %p118 = por %p116, %p117
    %p119 = scmp.ne.s32.totalorder %s111, %s113
    %p120 = scmp.eq.s32.totalorder %s19, 1
    %p121 = por %p119, %p120
    %p122 = scmp.ne.s32.totalorder %s113, %s114
    %p123 = scmp.eq.s32.totalorder %s19, 0
    %p124 = por %p122, %p123
    %p125 = scmp.ne.s32.totalorder %s113, %s114
    %p126 = scmp.eq.s32.totalorder %s20, 1
    %p127 = por %p125, %p126
    %p129 = scmp.ne.s32.totalorder %s114, %s128
    %p130 = scmp.eq.s32.totalorder %s20, 0
    %p131 = por %p129, %p130
    %s133 = sadd.s32 %s132, 1
    %p136 = scmp.eq.s32.totalorder %s14, 1
    %p137 = scmp.ne.s32.totalorder %s132, %s134
    %p138 = scmp.eq.s32.totalorder %s14, 0
    %p139 = por %p137, %p138
    %p140 = scmp.ne.s32.totalorder %s132, %s134
    %p141 = scmp.eq.s32.totalorder %s19, 1
    %p142 = por %p140, %p141
    %p143 = scmp.ne.s32.totalorder %s134, %s135
    %p144 = scmp.eq.s32.totalorder %s19, 0
    %p145 = por %p143, %p144
    %p146 = scmp.ne.s32.totalorder %s134, %s135
    %p147 = scmp.eq.s32.totalorder %s20, 1
    %p148 = por %p146, %p147
    %p150 = scmp.ne.s32.totalorder %s135, %s149
    %p151 = scmp.eq.s32.totalorder %s20, 0
    %p152 = por %p150, %p151
    %s154 = sadd.s32 %s153, 1
    %p157 = scmp.eq.s32.totalorder %s14, 1
    %p158 = scmp.ne.s32.totalorder %s153, %s155
    %p159 = scmp.eq.s32.totalorder %s14, 0
    %p160 = por %p158, %p159
    %p161 = scmp.ne.s32.totalorder %s153, %s155
    %p162 = scmp.eq.s32.totalorder %s19, 1
    %p163 = por %p161, %p162
    %p164 = scmp.ne.s32.totalorder %s155, %s156
    %p165 = scmp.eq.s32.totalorder %s19, 0
    %p166 = por %p164, %p165
    %p167 = scmp.ne.s32.totalorder %s155, %s156
    %p168 = scmp.eq.s32.totalorder %s20, 1
    %p169 = por %p167, %p168
    %p171 = scmp.ne.s32.totalorder %s156, %s170
    %p172 = scmp.eq.s32.totalorder %s20, 0
    %p173 = por %p171, %p172
    %s175 = sadd.s32 %s174, 1
    %p178 = scmp.eq.s32.totalorder %s14, 1
    %p179 = scmp.ne.s32.totalorder %s174, %s176
    %p180 = scmp.eq.s32.totalorder %s14, 0
    %p181 = por %p179, %p180
    %p182 = scmp.ne.s32.totalorder %s174, %s176
    %p183 = scmp.eq.s32.totalorder %s19, 1
    %p184 = por %p182, %p183
    %p185 = scmp.ne.s32.totalorder %s176, %s177
    %p186 = scmp.eq.s32.totalorder %s19, 0
    %p187 = por %p185, %p186
    %p188 = scmp.ne.s32.totalorder %s176, %s177
    %p189 = scmp.eq.s32.totalorder %s20, 1
    %p190 = por %p188, %p189
    %p192 = scmp.ne.s32.totalorder %s177, %s191
    %p193 = scmp.eq.s32.totalorder %s20, 0
    %p194 = por %p192, %p193
    %s195 = ssub.s32 %s14, %s21
    %p196 = scmp.eq.s32.totalorder %s195, 0
    %s198 = sadd.s32 %s197, 1
    %s199 = scalar_select %p196, %s197, %s198
    %p202 = pneg %p196
    %p203 = scmp.eq.s32.totalorder %s14, 1
    %p204 = por %p202, %p203
    %p205 = scmp.ne.s32.totalorder %s197, %s200
    %p206 = scmp.eq.s32.totalorder %s14, 0
    %p207 = por %p205, %p206
    %p208 = scmp.ne.s32.totalorder %s197, %s200
    %p209 = scmp.eq.s32.totalorder %s19, 1
    %p210 = por %p208, %p209
    %p211 = scmp.ne.s32.totalorder %s200, %s201
    %p212 = scmp.eq.s32.totalorder %s19, 0
    %p213 = por %p211, %p212
    %p214 = scmp.ne.s32.totalorder %s200, %s201
    %p215 = scmp.eq.s32.totalorder %s20, 1
    %p216 = por %p214, %p215
    %p218 = scmp.ne.s32.totalorder %s201, %s217
    %p219 = scmp.eq.s32.totalorder %s20, 0
    %p220 = por %p218, %p219
    %p221 = scmp.le.s32.totalorder 1, %s14
    %p222 = scmp.lt.s32.totalorder %s14, 3
    %p223 = pnand %p221, %p222
    %p224 = pneg %p223
    // Predicated region
    $region9: #{conv_block_forward.1} parent=5 // pred_check
      _
    $region10: #{conv_block_forward.1} parent=5 // pred_check_branch
      %226 = sbr.rel (%p223) target = $region12
    $region11: #{conv_block_forward.1} parent=5 // pred_region
      %s227 = ssub.s32 %s14, 1
      // Predicated region
      $region13: #{conv_block_forward.1} parent=11 // pred_check
        %p228 = pneg %p61
      $region14: #{conv_block_forward.1} parent=11 // pred_check_branch
        %230 = sbr.rel (%p228) target = $region16
      $region15: #{conv_block_forward.1} parent=11 // pred_region
        _
      $region16: #{conv_block_forward.1} parent=11 // pred_fallthru
        _
      // Predicated region
      $region17: #{conv_block_forward.1} parent=11 // pred_check
        %p231 = pneg %p82
      $region18: #{conv_block_forward.1} parent=11 // pred_check_branch
        %233 = sbr.rel (%p231) target = $region20
      $region19: #{conv_block_forward.1} parent=11 // pred_region
        _
      $region20: #{conv_block_forward.1} parent=11 // pred_fallthru
        _
      // Predicated region
      $region21: #{conv_block_forward.1} parent=11 // pred_check
        %p234 = pneg %p103
      $region22: #{conv_block_forward.1} parent=11 // pred_check_branch
        %236 = sbr.rel (%p234) target = $region24
      $region23: #{conv_block_forward.1} parent=11 // pred_region
        _
      $region24: #{conv_block_forward.1} parent=11 // pred_fallthru
        _
      // Predicated region
      $region25: #{conv_block_forward.1} parent=11 // pred_check
        %p237 = pneg %p124
      $region26: #{conv_block_forward.1} parent=11 // pred_check_branch
        %239 = sbr.rel (%p237) target = $region28
      $region27: #{conv_block_forward.1} parent=11 // pred_region
        _
      $region28: #{conv_block_forward.1} parent=11 // pred_fallthru
        _
      // Predicated region
      $region29: #{conv_block_forward.1} parent=11 // pred_check
        %p240 = pneg %p145
      $region30: #{conv_block_forward.1} parent=11 // pred_check_branch
        %242 = sbr.rel (%p240) target = $region32
      $region31: #{conv_block_forward.1} parent=11 // pred_region
        _
      $region32: #{conv_block_forward.1} parent=11 // pred_fallthru
        _
      // Predicated region
      $region33: #{conv_block_forward.1} parent=11 // pred_check
        %p243 = pneg %p166
      $region34: #{conv_block_forward.1} parent=11 // pred_check_branch
        %245 = sbr.rel (%p243) target = $region36
      $region35: #{conv_block_forward.1} parent=11 // pred_region
        _
      $region36: #{conv_block_forward.1} parent=11 // pred_fallthru
        _
      // Predicated region
      $region37: #{conv_block_forward.1} parent=11 // pred_check
        %p246 = pneg %p187
      $region38: #{conv_block_forward.1} parent=11 // pred_check_branch
        %248 = sbr.rel (%p246) target = $region40
      $region39: #{conv_block_forward.1} parent=11 // pred_region
        _
      $region40: #{conv_block_forward.1} parent=11 // pred_fallthru
        _
    $region12: #{conv_block_forward.1} parent=5 // pred_fallthru
      _
    %p249 = scmp.lt.s32.totalorder %s14, 2
    // Predicated region
    $region41: #{conv_block_forward.1} parent=5 // pred_check
      %p250 = pneg %p249
    $region42: #{conv_block_forward.1} parent=5 // pred_check_branch
      %252 = sbr.rel (%p250) target = $region44
    $region43: #{conv_block_forward.1} parent=5 // pred_region
      // Predicated region
      $region45: #{conv_block_forward.1} parent=43 // pred_check
        %p253 = pneg %p34
      $region46: #{conv_block_forward.1} parent=43 // pred_check_branch
        %255 = sbr.rel (%p253) target = $region48
      $region47: #{conv_block_forward.1} parent=43 // pred_region
        %p256 = scmp.lt.s32.totalorder %s14, 1
        %s257 = scalar_select %p256, %s14, 1
        %s258 = smul.addr %s257, 2
        %s259 = smul.addr %s258, 4
        %s260 = scalar_lea.vmem %s0, %s259
      $region48: #{conv_block_forward.1} parent=43 // pred_fallthru
        _
    $region44: #{conv_block_forward.1} parent=5 // pred_fallthru
      _
    %p261 = scmp.le.s32.totalorder 1, %s14
    %p262 = scmp.lt.s32.totalorder %s14, 3
    %p263 = pnand %p261, %p262
    %p264 = pneg %p263
    // Predicated region
    $region49: #{conv_block_forward.1} parent=5 // pred_check
      _
    $region50: #{conv_block_forward.1} parent=5 // pred_check_branch
      %266 = sbr.rel (%p263) target = $region52
    $region51: #{conv_block_forward.1} parent=5 // pred_region
      %s267 = ssub.s32 %s14, 1
      %p268 = scmp.lt.s32.totalorder %s19, 1
      %s269 = scalar_select %p268, %s19, 1
      %s270 = smul.addr %s269, 2
      %s271 = smul.addr %s270, 4
      %s272 = scalar_lea.vmem %s0, %s271
      %p273 = pneg %p40
      %p274 = pneg %p37
      %p275 = pneg %p61
      %p276 = pneg %p58
      %p277 = pneg %p82
      %p278 = pneg %p79
      %p279 = pneg %p103
      %p280 = pneg %p100
      %p281 = pneg %p124
      %p282 = pneg %p121
      %p283 = pneg %p145
      %p284 = pneg %p142
      %p285 = pneg %p166
      %p286 = pneg %p163
      %p287 = pneg %p187
      %p288 = pneg %p184
      %p289 = pneg %p213
      %p290 = pneg %p210
      %p291 = scmp.lt.s32.totalorder %s19, 1
      %s292 = scalar_select %p291, %s19, 1
      %s293 = smul.addr %s292, 2
      %s294 = smul.addr %s293, 4
      %s295 = scalar_lea.vmem %s8, %s294
      %p296 = scmp.lt.s32.totalorder %s19, 1
      %s297 = scalar_select %p296, %s19, 1
      %s298 = smul.addr %s297, 2
      %s299 = smul.addr %s298, 4
      %s300 = scalar_lea.vmem %s0, %s299
      %p301 = scmp.lt.s32.totalorder %s19, 1
      %s302 = scalar_select %p301, %s19, 1
      %s303 = smul.addr %s302, 2
      %s304 = smul.addr %s303, 4
      %s305 = scalar_lea.vmem %s8, %s304
      %v306 = vld [vmem:[%s300] sm:$0xff]
      %v307 = vld [vmem:[%s1] sm:$0xff]
      %v308 = vld [vmem:[%s1 + $0x8] sm:$0xff]
      %v309 = vld [vmem:[%s1 + $0x10] sm:$0x1]
      %v310 = vld [vmem:[%s1 + $0x18] sm:$0x1]
      %v311 = vld [vmem:[%s3] sm:$0xf]
      %313 = vst [vmem:[#allocation1] ss:$2 sm:$0xff] %v306
      %v314 = vld.sshfl [vmem:[#allocation1 + $0x8] sm:$0xff pattern:$0x75316420]
      %315 = vrot.lane.b32.xlu0 %v314, 17
      %v316 = vpop.permute.xlu0 %315
      %318 = vst [vmem:[#allocation1] ss:$2 sm:$0xff] %v306
      %v319 = vld.sshfl [vmem:[#allocation1] sm:$0xff pattern:$0x75316420]
      %v320 = vld.sshfl [vmem:[#allocation1 + $0x8] sm:$0xff pattern:$0x75316420]
      %321 = vrot.lane.b32.xlu0 %v319, 17
      %v322 = vpop.permute.xlu0 %321
      %323 = vrot.lane.b32.xlu0 %v320, 17
      %v324 = vpop.permute.xlu0 %323
      %vm325 = vcmask 138240
      %v326 = vsel %vm325, %v322, %v324
      %v329 = vsel %vm325, %v316, %v322
      %v330 = vperm.slane %v307, 0
      %v331 = vperm.slane %v308, 0
      %v332 = vmul.f32 %v329, %v330
      %v333 = vmul.f32 %v326, %v331
      %334 = vst [vmem:[#allocation1] ss:$2 sm:$0xff] %v306
      %v335 = vld.sshfl [vmem:[#allocation1 + $0x8] sm:$0xff pattern:$0x75316420]
      %336 = vrot.lane.b32.xlu0 %v335, 16
      %v337 = vpop.permute.xlu0 %336
      %339 = vst [vmem:[#allocation1] ss:$2 sm:$0xff] %v306
      %v340 = vld.sshfl [vmem:[#allocation1] sm:$0xff pattern:$0x75316420]
      %v341 = vld.sshfl [vmem:[#allocation1 + $0x8] sm:$0xff pattern:$0x75316420]
      %342 = vrot.lane.b32.xlu0 %v340, 16
      %v343 = vpop.permute.xlu0 %342
      %344 = vrot.lane.b32.xlu0 %v341, 16
      %v345 = vpop.permute.xlu0 %344
      %vm346 = vcmask 130048
      %v347 = vsel %vm346, %v343, %v345
      %v350 = vsel %vm346, %v337, %v343
      %v351 = vperm.slane %v307, 1
      %v352 = vperm.slane %v308, 1
      %v353 = vmul.f32 %v350, %v351
      %v354 = vmul.f32 %v347, %v352
      %355 = vst [vmem:[#allocation1] ss:$2 sm:$0xff] %v306
      %v356 = vld.sshfl [vmem:[#allocation1 + $0x8] sm:$0xff pattern:$0x75316420]
      %357 = vrot.lane.b32.xlu0 %v356, 15
      %v358 = vpop.permute.xlu0 %357
      %360 = vst [vmem:[#allocation1] ss:$2 sm:$0xff] %v306
      %v361 = vld.sshfl [vmem:[#allocation1] sm:$0xff pattern:$0x75316420]
      %v362 = vld.sshfl [vmem:[#allocation1 + $0x8] sm:$0xff pattern:$0x75316420]
      %363 = vrot.lane.b32.xlu0 %v361, 15
      %v364 = vpop.permute.xlu0 %363
      %365 = vrot.lane.b32.xlu0 %v362, 15
      %v366 = vpop.permute.xlu0 %365
      %vm367 = vcmask 121856
      %v368 = vsel %vm367, %v364, %v366
      %v371 = vsel %vm367, %v358, %v364
      %v372 = vperm.slane %v307, 2
      %v373 = vperm.slane %v308, 2
      %v374 = vmul.f32 %v371, %v372
      %v375 = vmul.f32 %v368, %v373
      %376 = vst [vmem:[#allocation1] ss:$2 sm:$0xff] %v306
      %v377 = vld.sshfl [vmem:[#allocation1 + $0x8] sm:$0xff pattern:$0x75316420]
      %378 = vrot.lane.b32.xlu0 %v377, 1
      %v379 = vpop.permute.xlu0 %378
      %381 = vst [vmem:[#allocation1] ss:$2 sm:$0xff] %v306
      %v382 = vld.sshfl [vmem:[#allocation1] sm:$0xff pattern:$0x75316420]
      %v383 = vld.sshfl [vmem:[#allocation1 + $0x8] sm:$0xff pattern:$0x75316420]
      %384 = vrot.lane.b32.xlu0 %v382, 1
      %v385 = vpop.permute.xlu0 %384
      %386 = vrot.lane.b32.xlu0 %v383, 1
      %v387 = vpop.permute.xlu0 %386
      %vm388 = vcmask 7168
      %v389 = vsel %vm388, %v385, %v387
      %v392 = vsel %vm388, %v379, %v385
      %v393 = vperm.slane %v307, 3
      %v394 = vperm.slane %v308, 3
      %v395 = vmul.f32 %v392, %v393
      %v396 = vmul.f32 %v389, %v394
      %397 = vst [vmem:[#allocation1] ss:$2 sm:$0xff] %v306
      %v398 = vld.sshfl [vmem:[#allocation1] sm:$0xff pattern:$0x75316420]
      %v399 = vld.sshfl [vmem:[#allocation1 + $0x8] sm:$0xff pattern:$0x75316420]
      %400 = vrot.lane.b32.xlu0 %v398, 127
      %v401 = vpop.permute.xlu0 %400
      %402 = vrot.lane.b32.xlu0 %v399, 127
      %v403 = vpop.permute.xlu0 %402
      %vm404 = vcmask 1039360
      %v405 = vsel %vm404, %v401, %v403
      %408 = vst [vmem:[#allocation1] ss:$2 sm:$0xff] %v306
      %v409 = vld.sshfl [vmem:[#allocation1] sm:$0xff pattern:$0x75316420]
      %410 = vrot.lane.b32.xlu0 %v409, 127
      %v411 = vpop.permute.xlu0 %410
      %v413 = vsel %vm404, %v403, %v411
      %v414 = vperm.slane %v307, 5
      %v415 = vperm.slane %v308, 5
      %v416 = vmul.f32 %v405, %v414
      %v417 = vmul.f32 %v413, %v415
      %418 = vst [vmem:[#allocation1] ss:$2 sm:$0xff] %v306
      %v419 = vld.sshfl [vmem:[#allocation1] sm:$0xff pattern:$0x75316420]
      %v420 = vld.sshfl [vmem:[#allocation1 + $0x8] sm:$0xff pattern:$0x75316420]
      %421 = vrot.lane.b32.xlu0 %v419, 113
      %v422 = vpop.permute.xlu0 %421
      %423 = vrot.lane.b32.xlu0 %v420, 113
      %v424 = vpop.permute.xlu0 %423
      %vm425 = vcmask 924672
      %v426 = vsel %vm425, %v422, %v424
      %429 = vst [vmem:[#allocation1] ss:$2 sm:$0xff] %v306
      %v430 = vld.sshfl [vmem:[#allocation1] sm:$0xff pattern:$0x75316420]
      %431 = vrot.lane.b32.xlu0 %v430, 113
      %v432 = vpop.permute.xlu0 %431
      %v434 = vsel %vm425, %v424, %v432
      %v435 = vperm.slane %v307, 6
      %v436 = vperm.slane %v308, 6
      %v437 = vmul.f32 %v426, %v435
      %v438 = vmul.f32 %v434, %v436
      %439 = vst [vmem:[#allocation1] ss:$2 sm:$0xff] %v306
      %v440 = vld.sshfl [vmem:[#allocation1] sm:$0xff pattern:$0x75316420]
      %v441 = vld.sshfl [vmem:[#allocation1 + $0x8] sm:$0xff pattern:$0x75316420]
      %442 = vrot.lane.b32.xlu0 %v440, 112
      %v443 = vpop.permute.xlu0 %442
      %444 = vrot.lane.b32.xlu0 %v441, 112
      %v445 = vpop.permute.xlu0 %444
      %vm446 = vcmask 916480
      %v447 = vsel %vm446, %v443, %v445
      %450 = vst [vmem:[#allocation1] ss:$2 sm:$0xff] %v306
      %v451 = vld.sshfl [vmem:[#allocation1] sm:$0xff pattern:$0x75316420]
      %452 = vrot.lane.b32.xlu0 %v451, 112
      %v453 = vpop.permute.xlu0 %452
      %v455 = vsel %vm446, %v445, %v453
      %v456 = vperm.slane %v307, 7
      %v457 = vperm.slane %v308, 7
      %v458 = vmul.f32 %v447, %v456
      %v459 = vmul.f32 %v455, %v457
      %460 = vst [vmem:[#allocation1] ss:$2 sm:$0xff] %v306
      %v461 = vld.sshfl [vmem:[#allocation1] sm:$0xff pattern:$0x75316420]
      %v462 = vld.sshfl [vmem:[#allocation1 + $0x8] sm:$0xff pattern:$0x75316420]
      %463 = vrot.lane.b32.xlu0 %v461, 111
      %v464 = vpop.permute.xlu0 %463
      %465 = vrot.lane.b32.xlu0 %v462, 111
      %v466 = vpop.permute.xlu0 %465
      %vm467 = vcmask 908288
      %v468 = vsel %vm467, %v464, %v466
      %471 = vst [vmem:[#allocation1] ss:$2 sm:$0xff] %v306
      %v472 = vld.sshfl [vmem:[#allocation1] sm:$0xff pattern:$0x75316420]
      %473 = vrot.lane.b32.xlu0 %v472, 111
      %v474 = vpop.permute.xlu0 %473
      %v476 = vsel %vm467, %v466, %v474
      %v477 = vperm.slane %v309, 0
      %v478 = vperm.slane %v310, 0
      %v479 = vmul.f32 %v468, %v477
      %v480 = vmul.f32 %v476, %v478
      %v483 = vrot.slane %v353, 4
      %v484 = vrot.slane %v354, 4
      %v489 = vrot.slane %v395, 4
      %v490 = vrot.slane %v396, 4
      %493 = vst [vmem:[#allocation1] ss:$2 sm:$0xff] %v306
      %v494 = vld.sshfl [vmem:[#allocation1] sm:$0xff pattern:$0x75316420]
      %v495 = vld.sshfl [vmem:[#allocation1 + $0x8] sm:$0xff pattern:$0x75316420]
      %v500 = vrot.slane %v416, 4
      %v501 = vrot.slane %v417, 4
      %v506 = vrot.slane %v458, 4
      %v507 = vrot.slane %v459, 4
      %vm510 = vcmask 1043456
      %v511 = vsel %vm510, %v332, %v483
      %v512 = vsel %vm510, %v333, %v484
      %v513 = vsel %vm510, %v374, %v489
      %v514 = vsel %vm510, %v375, %v490
      %v515 = vsel %vm510, %v494, %v500
      %v516 = vsel %vm510, %v495, %v501
      %v517 = vsel %vm510, %v437, %v506
      %v518 = vsel %vm510, %v438, %v507
      %v519 = vld [vmem:[%s2] sm:$0xf]
      %vm520 = vcmask 293888
      %v522 = vsel %vm520, %v519, 0
      %v525 = vsel %vm510, %v479, 0
      %v528 = vsel %vm510, %v480, 0
      %530 = vmatpush.msra.mxu0 0.0
      %531 = vmatpush.msra.mxu0 0.0
      %532 = vmatpush.msra.mxu0 0.0
      %533 = vmatpush.msra.mxu0 0.0
      %534 = vmatpush.msra.mxu0 0.0
      %535 = vmatpush.msra.mxu0 0.0
      %536 = vmatpush.msra.mxu0 0.0
      %537 = vmatpush.msra.mxu0 0.0
      %538 = vmatpush.msra.mxu0 0.0
      %539 = vmatpush.msra.mxu0 0.0
      %540 = vmatpush.msra.mxu0 0.0
      %541 = vmatpush.msra.mxu0 %v525
      %542 = vmatpush.msra.mxu0 %v517
      %543 = vmatpush.msra.mxu0 %v515
      %544 = vmatpush.msra.mxu0 %v513
      %545 = vmatpush.msra.mxu0 %v511
      %546 = vmatmul.f32.gmra.mxu0 %v522
      %v547 = vpop.f32.mrf.mxu0
      %v548 = vadd.f32 0.0, %v547
      %549 = vdwg.mxu0
      %550 = vmatpush.msra.mxu0 0.0
      %551 = vmatpush.msra.mxu0 0.0
      %552 = vmatpush.msra.mxu0 0.0
      %553 = vmatpush.msra.mxu0 0.0
      %554 = vmatpush.msra.mxu0 0.0
      %555 = vmatpush.msra.mxu0 0.0
      %556 = vmatpush.msra.mxu0 0.0
      %557 = vmatpush.msra.mxu0 0.0
      %558 = vmatpush.msra.mxu0 0.0
      %559 = vmatpush.msra.mxu0 0.0
      %560 = vmatpush.msra.mxu0 0.0
      %561 = vmatpush.msra.mxu0 %v528
      %562 = vmatpush.msra.mxu0 %v518
      %563 = vmatpush.msra.mxu0 %v516
      %564 = vmatpush.msra.mxu0 %v514
      %565 = vmatpush.msra.mxu0 %v512
      %566 = vmatmul.f32.gmra.mxu0 %v522
      %v567 = vpop.f32.mrf.mxu0
      %v568 = vadd.f32 0.0, %v567
      %569 = vdwg.mxu0
      %571 = vset.pattern.permute.xlu0 0
      %572 = vperm.xlu0 %571, %v311
      %v573 = vpop.permute.xlu0 %572
      %v575 = vmul.f32 %v573, %v548
      %v576 = vmul.f32 %v573, %v568
      %v577 = vld [vmem:[%s4] sm:$0xf]
      %579 = vset.pattern.permute.xlu0 0
      %580 = vperm.xlu0 %579, %v577
      %v581 = vpop.permute.xlu0 %580
      %v583 = vadd.f32 %v575, %v581
      %v584 = vadd.f32 %v576, %v581
      %v585 = vmax.f32 %v583, 0.0
      %v586 = vmax.f32 %v584, 0.0
      %v587 = vld [vmem:[%s6] sm:$0xf]
      %589 = vrot.lane.b32.xlu0 %v586, 17
      %v590 = vpop.permute.xlu0 %589
      %593 = vrot.lane.b32.xlu0 %v585, 17
      %v594 = vpop.permute.xlu0 %593
      %v595 = vsel %vm325, %v594, %v590
      %v598 = vsel %vm325, %v590, %v594
      %v599 = vmul.f32 %v598, %v330
      %v600 = vmul.f32 %v595, %v331
      %601 = vrot.lane.b32.xlu0 %v586, 16
      %v602 = vpop.permute.xlu0 %601
      %604 = vrot.lane.b32.xlu0 %v585, 16
      %v605 = vpop.permute.xlu0 %604
      %v606 = vsel %vm346, %v605, %v602
      %v609 = vsel %vm346, %v602, %v605
      %v610 = vmul.f32 %v609, %v351
      %v611 = vmul.f32 %v606, %v352
      %612 = vrot.lane.b32.xlu0 %v586, 15
      %v613 = vpop.permute.xlu0 %612
      %615 = vrot.lane.b32.xlu0 %v585, 15
      %v616 = vpop.permute.xlu0 %615
      %v617 = vsel %vm367, %v616, %v613
      %v620 = vsel %vm367, %v613, %v616
      %v621 = vmul.f32 %v620, %v372
      %v622 = vmul.f32 %v617, %v373
      %623 = vrot.lane.b32.xlu0 %v586, 1
      %v624 = vpop.permute.xlu0 %623
      %626 = vrot.lane.b32.xlu0 %v585, 1
      %v627 = vpop.permute.xlu0 %626
      %v628 = vsel %vm388, %v627, %v624
      %v631 = vsel %vm388, %v624, %v627
      %v632 = vmul.f32 %v631, %v393
      %v633 = vmul.f32 %v628, %v394
      %634 = vrot.lane.b32.xlu0 %v585, 127
      %v635 = vpop.permute.xlu0 %634
      %636 = vrot.lane.b32.xlu0 %v586, 127
      %v637 = vpop.permute.xlu0 %636
      %v638 = vsel %vm404, %v635, %v637
      %v642 = vsel %vm404, %v637, %v635
      %v643 = vmul.f32 %v638, %v414
      %v644 = vmul.f32 %v642, %v415
      %645 = vrot.lane.b32.xlu0 %v585, 113
      %v646 = vpop.permute.xlu0 %645
      %647 = vrot.lane.b32.xlu0 %v586, 113
      %v648 = vpop.permute.xlu0 %647
      %v649 = vsel %vm425, %v646, %v648
      %v653 = vsel %vm425, %v648, %v646
      %v654 = vmul.f32 %v649, %v435
      %v655 = vmul.f32 %v653, %v436
      %656 = vrot.lane.b32.xlu0 %v585, 112
      %v657 = vpop.permute.xlu0 %656
      %658 = vrot.lane.b32.xlu0 %v586, 112
      %v659 = vpop.permute.xlu0 %658
      %v660 = vsel %vm446, %v657, %v659
      %v664 = vsel %vm446, %v659, %v657
      %v665 = vmul.f32 %v660, %v456
      %v666 = vmul.f32 %v664, %v457
      %667 = vrot.lane.b32.xlu0 %v585, 111
      %v668 = vpop.permute.xlu0 %667
      %669 = vrot.lane.b32.xlu0 %v586, 111
      %v670 = vpop.permute.xlu0 %669
      %v671 = vsel %vm467, %v668, %v670
      %v675 = vsel %vm467, %v670, %v668
      %v676 = vmul.f32 %v671, %v477
      %v677 = vmul.f32 %v675, %v478
      %v680 = vrot.slane %v610, 4
      %v681 = vrot.slane %v611, 4
      %v686 = vrot.slane %v632, 4
      %v687 = vrot.slane %v633, 4
      %v692 = vrot.slane %v643, 4
      %v693 = vrot.slane %v644, 4
      %v698 = vrot.slane %v665, 4
      %v699 = vrot.slane %v666, 4
      %v702 = vsel %vm510, %v599, %v680
      %v703 = vsel %vm510, %v600, %v681
      %v704 = vsel %vm510, %v621, %v686
      %v705 = vsel %vm510, %v622, %v687
      %v706 = vsel %vm510, %v585, %v692
      %v707 = vsel %vm510, %v586, %v693
      %v708 = vsel %vm510, %v654, %v698
      %v709 = vsel %vm510, %v655, %v699
      %v710 = vld [vmem:[%s5] sm:$0xf]
      %v712 = vsel %vm520, %v710, 0
      %v715 = vsel %vm510, %v676, 0
      %v718 = vsel %vm510, %v677, 0
      %720 = vmatpush.msra.mxu0 0.0
      %721 = vmatpush.msra.mxu0 0.0
      %722 = vmatpush.msra.mxu0 0.0
      %723 = vmatpush.msra.mxu0 0.0
      %724 = vmatpush.msra.mxu0 0.0
      %725 = vmatpush.msra.mxu0 0.0
      %726 = vmatpush.msra.mxu0 0.0
      %727 = vmatpush.msra.mxu0 0.0
      %728 = vmatpush.msra.mxu0 0.0
      %729 = vmatpush.msra.mxu0 0.0
      %730 = vmatpush.msra.mxu0 0.0
      %731 = vmatpush.msra.mxu0 %v715
      %732 = vmatpush.msra.mxu0 %v708
      %733 = vmatpush.msra.mxu0 %v706
      %734 = vmatpush.msra.mxu0 %v704
      %735 = vmatpush.msra.mxu0 %v702
      %736 = vmatmul.f32.gmra.mxu0 %v712
      %v737 = vpop.f32.mrf.mxu0
      %v738 = vadd.f32 0.0, %v737
      %739 = vdwg.mxu0
      %740 = vmatpush.msra.mxu0 0.0
      %741 = vmatpush.msra.mxu0 0.0
      %742 = vmatpush.msra.mxu0 0.0
      %743 = vmatpush.msra.mxu0 0.0
      %744 = vmatpush.msra.mxu0 0.0
      %745 = vmatpush.msra.mxu0 0.0
      %746 = vmatpush.msra.mxu0 0.0
      %747 = vmatpush.msra.mxu0 0.0
      %748 = vmatpush.msra.mxu0 0.0
      %749 = vmatpush.msra.mxu0 0.0
      %750 = vmatpush.msra.mxu0 0.0
      %751 = vmatpush.msra.mxu0 %v718
      %752 = vmatpush.msra.mxu0 %v709
      %753 = vmatpush.msra.mxu0 %v707
      %754 = vmatpush.msra.mxu0 %v705
      %755 = vmatpush.msra.mxu0 %v703
      %756 = vmatmul.f32.gmra.mxu0 %v712
      %v757 = vpop.f32.mrf.mxu0
      %v758 = vadd.f32 0.0, %v757
      %759 = vdwg.mxu0
      %761 = vset.pattern.permute.xlu0 0
      %762 = vperm.xlu0 %761, %v587
      %v763 = vpop.permute.xlu0 %762
      %v765 = vmul.f32 %v763, %v738
      %v766 = vmul.f32 %v763, %v758
      %v767 = vld [vmem:[%s7] sm:$0xf]
      %769 = vset.pattern.permute.xlu0 0
      %770 = vperm.xlu0 %769, %v767
      %v771 = vpop.permute.xlu0 %770
      %v773 = vadd.f32 %v765, %v771
      %v774 = vadd.f32 %v766, %v771
      %v775 = vmax.f32 %v773, 0.0
      %v776 = vmax.f32 %v774, 0.0
      %777 = vst [vmem:[#allocation1] ss:$2 sm:$0xff] %v306
      %v778 = vld.sshfl [vmem:[#allocation1] sm:$0xff pattern:$0x75316420]
      %v779 = vld.sshfl [vmem:[#allocation1 + $0x8] sm:$0xff pattern:$0x75316420]
      %v782 = vadd.f32 %v775, %v778
      %v783 = vadd.f32 %v776, %v779
      %v784 = vsel %vm510, %v782, 0.0
      %v785 = vsel %vm510, %v783, 0.0
      %v786 = vadd.f32 %v784, %v785
      %787 = vadd.xlane.f32.xlu0 %v786
      %v788 = vpop.xlane.xlu0 %787
      %v789 = vmul.f32 %v788, 0.00390625
      %v790 = vmul.f32 %v782, %v782
      %v791 = vmul.f32 %v783, %v783
      %v792 = vsel %vm510, %v790, 0.0
      %v793 = vsel %vm510, %v791, 0.0
      %v794 = vadd.f32 %v792, %v793
      %795 = vadd.xlane.f32.xlu0 %v794
      %v796 = vpop.xlane.xlu0 %795
      %v797 = vmul.f32 %v796, 0.00390625
      %v798 = vmul.f32 %v789, %v789
      %v799 = vsub.f32 %v797, %v798
      %v800 = vsub.f32 %v782, %v789
      %v801 = vsub.f32 %v783, %v789
      %v802 = vadd.f32 %v799, 1e-05
      %v803 = vrsqrt.pop %v802
      %v804 = vmul.f32 %v803, %v802
      %v805 = vmul.f32 %v804, %v803
      %v806 = vmul.f32 0.5, %v805
      %v807 = vsub.f32 1.5, %v806
      %v808 = vmul.f32 %v803, %v807
      %vm809 = vweird.f32 %v802
      %vm810 = vweird.f32 %v803
      %vm811 = vmor %vm809, %vm810
      %v812 = vsel %vm811, %v803, %v808
      %v813 = vmul.f32 %v800, %v812
      %v814 = vmul.f32 %v801, %v812
      %v817 = vrot.slane %v814, 4
      %v818 = vsel %vm510, %v813, %v817
      %820 = vst [vmem:[%s305] sm:$0xff] %v818
      %p821 = scmp.lt.s32.totalorder %s19, 1
      %s822 = scalar_select %p821, %s19, 1
      %s823 = smul.addr %s822, 2
      %s824 = smul.addr %s823, 4
      %s825 = scalar_lea.vmem %s8, %s824
      // Predicated region
      $region53: #{conv_block_forward.1} parent=51 // pred_check
        %p826 = pneg %p210
      $region54: #{conv_block_forward.1} parent=51 // pred_check_branch
        %828 = sbr.rel (%p826) target = $region56
      $region55: #{conv_block_forward.1} parent=51 // pred_region
        _
      $region56: #{conv_block_forward.1} parent=51 // pred_fallthru
        _
    $region52: #{conv_block_forward.1} parent=5 // pred_fallthru
      _
    %p829 = scmp.le.s32.totalorder 2, %s14
    // Predicated region
    $region57: #{conv_block_forward.1} parent=5 // pred_check
      %p830 = pneg %p829
    $region58: #{conv_block_forward.1} parent=5 // pred_check_branch
      %832 = sbr.rel (%p830) target = $region60
    $region59: #{conv_block_forward.1} parent=5 // pred_region
      %s833 = ssub.s32 %s14, 2
      // Predicated region
      $region61: #{conv_block_forward.1} parent=59 // pred_check
        %p834 = pneg %p216
      $region62: #{conv_block_forward.1} parent=59 // pred_check_branch
        %836 = sbr.rel (%p834) target = $region64
      $region63: #{conv_block_forward.1} parent=59 // pred_region
        %p837 = scmp.lt.s32.totalorder %s20, 1
        %s838 = scalar_select %p837, %s20, 1
        %s839 = smul.addr %s838, 2
        %s840 = smul.addr %s839, 4
        %s841 = scalar_lea.vmem %s8, %s840
      $region64: #{conv_block_forward.1} parent=59 // pred_fallthru
        _
    $region60: #{conv_block_forward.1} parent=5 // pred_fallthru
      _
  $region6: #{conv_block_forward.1} parent=0 // loop_footer
    %s18 = sadd.s32 1, %s14
  $region7: #{conv_block_forward.1} parent=0 // loop_footer_branch
    %13 = sbr.rel target = $region3
  $region8: #{conv_block_forward.1} parent=0 // loop_exit
    _

</llo_original>
